<compile_context>
chip_gen: v7x
topology: tpu7x:2x2x1
jax: 0.10.0
libtpu: 0.0.40
codegen_flags: <defaults>
</compile_context>

<pallas_src>
import jax
import jax.numpy as jnp
from jax import lax
from jax.experimental import pallas as pl
from jax.experimental.pallas import tpu as pltpu


def _round_up(x, m):
    return ((x + m - 1) // m) * m


def _avgpool_matmul_kernel(a_ref, p_ref, o_ref):
    # a_ref: (TM, 4*Wo)  two input image rows per pooled row, concatenated
    # p_ref: (4*Wo, Wo)  0 / 0.25 pooling matrix (same block every grid step)
    # o_ref: (TM, Wo)
    acc = jnp.dot(
        a_ref[...],
        p_ref[...],
        preferred_element_type=jnp.float32,
        precision=lax.Precision.HIGHEST,
    )
    o_ref[...] = acc.astype(o_ref.dtype)


@jax.jit
def avg_pool_2x2(x):
    """AvgPool2d(kernel_size=2, stride=2) on an NCHW tensor via Pallas."""
    N, C, H, W = x.shape
    Ho, Wo = H // 2, W // 2
    if N * C * Ho * Wo == 0:
        return jnp.zeros((N, C, Ho, Wo), dtype=x.dtype)

    # PyTorch AvgPool2d (no padding) drops a trailing odd row/column.
    if H != 2 * Ho or W != 2 * Wo:
        x = x[:, :, : 2 * Ho, : 2 * Wo]

    M = N * C * Ho      # one matrix row per pooled output row
    K = 4 * Wo          # two input rows (width 2*Wo each), concatenated

    # Zero-copy row-major view: row r = [input row 2h | input row 2h+1].
    a = x.reshape(M, K)

    # Static pooling matrix: out[:, j] sums taps {2j, 2j+1, 2Wo+2j, 2Wo+2j+1}.
    tap_col = (jnp.arange(K, dtype=jnp.int32) % (2 * Wo)) // 2
    p = tap_col[:, None] == jnp.arange(Wo, dtype=jnp.int32)[None, :]
    p = (p.astype(jnp.float32) * 0.25).astype(x.dtype)   # 0.25 exact in bf16/f16/f32

    itemsize = jnp.dtype(x.dtype).itemsize
    sublane = {4: 8, 2: 16, 1: 32}.get(itemsize, 8)       # min 2nd-minor tile
    lane = 128

    # Size the row tile by VMEM bytes (input + output blocks + resident P,
    # padded to lane tiles), targeting ~6 MiB per pipeline buffer.
    k_pad = _round_up(K, lane)
    wo_pad = _round_up(Wo, lane)
    p_bytes = _round_up(K, sublane) * wo_pad * itemsize
    row_bytes = (k_pad + wo_pad) * itemsize
    budget = 6 * 1024 * 1024
    # TODO(synk): for huge Wo (>~1024 at f32) P itself outgrows VMEM; that case
    # would need a column-tiled pooling matmul, not implemented here.
    tm = max(sublane, ((budget - p_bytes) // row_bytes) // sublane * sublane)
    if tm >= M:
        tm = M                      # full-extent block dim is always legal
    grid = (pl.cdiv(M, tm),)

    cost = pl.CostEstimate(
        flops=2 * M * K * Wo,
        transcendentals=0,
        bytes_accessed=(M * K + M * Wo + K * Wo) * itemsize,
    )

    out = pl.pallas_call(
        _avgpool_matmul_kernel,
        out_shape=jax.ShapeDtypeStruct((M, Wo), x.dtype),
        grid=grid,
        in_specs=[
            pl.BlockSpec((tm, K), lambda i: (i, 0)),
            pl.BlockSpec((K, Wo), lambda i: (0, 0)),   # constant block: stays resident
        ],
        out_specs=pl.BlockSpec((tm, Wo), lambda i: (i, 0)),
        compiler_params=pltpu.CompilerParams(
            dimension_semantics=("parallel",),
            vmem_limit_bytes=32 * 1024 * 1024,
        ),
        cost_estimate=cost,
    )(a, p)

    return out.reshape(N, C, Ho, Wo)


class Downsample:
    """JAX/Pallas port of pidm.blocks.Downsample (no learnable parameters)."""

    def __init__(self, channels):
        self.channels = channels

    def __call__(self, x):
        assert x.shape[1] == self.channels
        return avg_pool_2x2(x)


if __name__ == "__main__":
    key = jax.random.PRNGKey(0)
    N, C, H, W = 2, 4, 16, 16
    x = jax.random.normal(key, (N, C, H, W), dtype=jnp.float32)

    mod = Downsample(channels=C)
    y = jax.block_until_ready(mod(x))

    # Pure-JAX reference.
    ref = x.reshape(N, C, H // 2, 2, W // 2, 2).mean(axis=(3, 5))
    assert y.shape == (N, C, H // 2, W // 2), y.shape
    assert jnp.allclose(y, ref, atol=1e-5, rtol=1e-5), float(
        jnp.max(jnp.abs(y - ref)))

    print("KERNEL_OK")
</pallas_src>

<mosaic_0001>
module attributes {stable_mosaic.version = 11 : i64} {
  func.func @_avgpool_matmul_kernel(%arg0: i32, %arg1: memref<64x32xf32, #tpu.memory_space<vmem>>, %arg2: memref<32x8xf32, #tpu.memory_space<vmem>>, %arg3: memref<64x8xf32, #tpu.memory_space<vmem>>) attributes {dimension_semantics = [#tpu.dimension_semantics<parallel>], iteration_bounds = array<i64: 1>, scalar_prefetch = 0 : i64, scratch_operands = 0 : i64, tpu.core_type = #tpu.core_type<tc>, window_params = [{transform_indices = @transform_0, window_bounds = array<i64: 64, 32>}, {pipeline_mode = #tpu.pipeline_mode<synchronous>, transform_indices = @transform_1, window_bounds = array<i64: 32, 8>}, {transform_indices = @transform_2, window_bounds = array<i64: 64, 8>}]} {
    %c0 = arith.constant 0 : index
    %c0_0 = arith.constant 0 : index
    %0 = vector.load %arg1[%c0, %c0_0] : memref<64x32xf32, #tpu.memory_space<vmem>>, vector<64x32xf32>
    %c0_1 = arith.constant 0 : index
    %c0_2 = arith.constant 0 : index
    %1 = vector.load %arg2[%c0_1, %c0_2] : memref<32x8xf32, #tpu.memory_space<vmem>>, vector<32x8xf32>
    %cst = arith.constant dense<0.000000e+00> : vector<64x8xf32>
    %2 = tpu.matmul %0, %1, %cst {dimension_numbers = #tpu.dot_dimension_numbers<[1], [0], [0], [1], [0, 0, 1, 1], [], []>, precision = #tpu.contract_precision<fp32>} : vector<64x32xf32>, vector<32x8xf32>, vector<64x8xf32> -> vector<64x8xf32>
    %c0_3 = arith.constant 0 : index
    %c0_4 = arith.constant 0 : index
    %3 = vector.load %arg3[%c0_3, %c0_4] : memref<64x8xf32, #tpu.memory_space<vmem>>, vector<64x8xf32>
    tpu.vector_store %arg3[%c0_3, %c0_4], %2 {strides = array<i32>} : memref<64x8xf32, #tpu.memory_space<vmem>>, vector<64x8xf32>,
    return
  }
  func.func @transform_0(%arg0: i32) -> (i32, i32) {
    %c0_i32 = arith.constant 0 : i32
    %c0_i32_0 = arith.constant 0 : i32
    return %arg0, %c0_i32 : i32, i32
  }
  func.func @transform_1(%arg0: i32) -> (i32, i32) {
    %c0_i32 = arith.constant 0 : i32
    %c0_i32_0 = arith.constant 0 : i32
    %c0_i32_1 = arith.constant 0 : i32
    return %c0_i32, %c0_i32_0 : i32, i32
  }
  func.func @transform_2(%arg0: i32) -> (i32, i32) {
    %c0_i32 = arith.constant 0 : i32
    %c0_i32_0 = arith.constant 0 : i32
    return %arg0, %c0_i32 : i32, i32
  }
}

</mosaic_0001>

<llo_original>
// kernel: avg_pool_2x2.1
$region0: #{avg_pool_2x2.1}
  #allocation0 [shape = 'u32[]', space=smem, size = 0x4, offset = 0x4, fixed_abs, tag = 'smem constant byte address 0x4 - core index']
  #allocation1 [shape = 'u32[144,128]{1,0:T(1,128)}', space=vmem, size = 0x12000, scoped, tag = 'internal scratch']
  %s0 = inlined_call_operand.vmem [shape: f32[64,32], index: 0, kind: input, shape index: {}]
  %s1 = inlined_call_operand.vmem [shape: f32[32,8], index: 1, kind: input, shape index: {}]
  %s2 = inlined_call_operand.hbm [shape: f32[64,8], index: 2, kind: output, shape index: {}]
  %s3 = sld [smem:[#allocation0]]
  $region18: #{avg_pool_2x2.1} parent=0
    _
  %s5 = ssub.s32 1, %s3
  %s6 = scalar_select 0, %s5, %s3
  $region1: #{avg_pool_2x2.1} parent=0
    #allocation2 [shape = 'u8[32768]{0}', space=vmem, size = 0x8000, scoped, tag = 'output window, operand 0, single buffered']
    #allocation3 [shape = 's32[1]{0}', space=sflag, size = 0x4, scoped, tag = 'scoped memory for avg_pool_2x2.1']
    %7 = vsyncpa [#allocation3], 0
    // Predicated region
    $region2: #{avg_pool_2x2.1} parent=1 // pred_check
      _
    $region3: #{avg_pool_2x2.1} parent=1 // pred_check_branch
      %9 = sbr.rel (0) target = $region5
    $region4: #{avg_pool_2x2.1} parent=1 // pred_region
      _
    $region5: #{avg_pool_2x2.1} parent=1 // pred_fallthru
      _
    // Predicated region
    $region6: #{avg_pool_2x2.1} parent=1 // pred_check
      _
    $region7: #{avg_pool_2x2.1} parent=1 // pred_check_branch
      %11 = sbr.rel (0) target = $region9
    $region8: #{avg_pool_2x2.1} parent=1 // pred_region
      _
    $region9: #{avg_pool_2x2.1} parent=1 // pred_fallthru
      _
    %v12 = vld [vmem:[%s0] sm:$0xff]
    %v13 = vld [vmem:[%s0 + $0x8] sm:$0xff]
    %v14 = vld [vmem:[%s0 + $0x10] sm:$0xff]
    %v15 = vld [vmem:[%s0 + $0x18] sm:$0xff]
    %v16 = vld [vmem:[%s0 + $0x20] sm:$0xff]
    %v17 = vld [vmem:[%s0 + $0x28] sm:$0xff]
    %v18 = vld [vmem:[%s0 + $0x30] sm:$0xff]
    %v19 = vld [vmem:[%s0 + $0x38] sm:$0xff]
    %v20 = vld [vmem:[%s1] sm:$0xff]
    %v21 = vld [vmem:[%s1 + $0x8] sm:$0xff]
    %v22 = vld [vmem:[%s1 + $0x10] sm:$0xff]
    %v23 = vld [vmem:[%s1 + $0x18] sm:$0xff]
    %vm24 = vcmask 261120
    %v26 = vsel %vm24, %v12, 0
    %v29 = vsel %vm24, %v13, 0
    %v32 = vsel %vm24, %v14, 0
    %v35 = vsel %vm24, %v15, 0
    %v38 = vsel %vm24, %v16, 0
    %v41 = vsel %vm24, %v17, 0
    %v44 = vsel %vm24, %v18, 0
    %v47 = vsel %vm24, %v19, 0
    %49 = vmatprep.subr.mxu0 0.0
    %v50 = vand.u32 %v20, 4294901760
    %51 = vmatpush1.msra.mxu0 %v50
    %52 = vmatprep.subr.mxu0 0.0
    %v53 = vand.u32 %v21, 4294901760
    %54 = vmatpush1.msra.mxu0 %v53
    %55 = vmatprep.subr.mxu0 0.0
    %v56 = vand.u32 %v22, 4294901760
    %57 = vmatpush1.msra.mxu0 %v56
    %58 = vmatprep.subr.mxu0 0.0
    %v59 = vand.u32 %v23, 4294901760
    %60 = vmatpush1.msra.mxu0 %v59
    %61 = vmatprep.subr.mxu0 0.0
    %62 = vmatpush1.msra.mxu0 0.0
    %63 = vmatprep.subr.mxu0 0.0
    %64 = vmatpush1.msra.mxu0 0.0
    %65 = vmatprep.subr.mxu0 0.0
    %66 = vmatpush1.msra.mxu0 0.0
    %67 = vmatprep.subr.mxu0 0.0
    %68 = vmatpush1.msra.mxu0 0.0
    %69 = vmatprep.subr.mxu0 0.0
    %70 = vmatpush1.msra.mxu0 0.0
    %71 = vmatprep.subr.mxu0 0.0
    %72 = vmatpush1.msra.mxu0 0.0
    %73 = vmatprep.subr.mxu0 0.0
    %74 = vmatpush1.msra.mxu0 0.0
    %75 = vmatprep.subr.mxu0 0.0
    %76 = vmatpush1.msra.mxu0 0.0
    %77 = vmatprep.subr.mxu0 0.0
    %78 = vmatpush1.msra.mxu0 0.0
    %79 = vmatprep.subr.mxu0 0.0
    %80 = vmatpush1.msra.mxu0 0.0
    %81 = vmatprep.subr.mxu0 0.0
    %82 = vmatpush1.msra.mxu0 0.0
    %83 = vmatprep.subr.mxu0 0.0
    %84 = vmatpush1.msra.mxu0 0.0
    %85 = vmatprep.subr.mxu0 0.0
    %86 = vmatpush1.msra.mxu0 0.0
    %87 = vmatprep.subr.mxu0 0.0
    %88 = vmatpush1.msra.mxu0 0.0
    %89 = vmatprep.subr.mxu0 0.0
    %90 = vmatpush1.msra.mxu0 0.0
    %91 = vmatprep.subr.mxu0 0.0
    %92 = vmatpush1.msra.mxu0 0.0
    %93 = vmatprep.subr.mxu0 0.0
    %94 = vmatpush1.msra.mxu0 0.0
    %95 = vmatprep.subr.mxu0 0.0
    %96 = vmatpush1.msra.mxu0 0.0
    %97 = vmatprep.subr.mxu0 0.0
    %98 = vmatpush1.msra.mxu0 0.0
    %99 = vmatprep.subr.mxu0 0.0
    %100 = vmatpush1.msra.mxu0 0.0
    %101 = vmatprep.subr.mxu0 0.0
    %102 = vmatpush1.msra.mxu0 0.0
    %103 = vmatprep.subr.mxu0 0.0
    %104 = vmatpush1.msra.mxu0 0.0
    %105 = vmatprep.subr.mxu0 0.0
    %106 = vmatpush1.msra.mxu0 0.0
    %107 = vmatprep.subr.mxu0 0.0
    %108 = vmatpush1.msra.mxu0 0.0
    %109 = vmatprep.subr.mxu0 0.0
    %110 = vmatpush1.msra.mxu0 0.0
    %111 = vmatprep.subr.mxu0 0.0
    %112 = vmatpush1.msra.mxu0 0.0
    %113 = vmatprep.subr.mxu0 0.0
    %114 = vmatpush1.msra.mxu0 0.0
    %115 = vmatprep.subr.mxu0 0.0
    %116 = vmatpush1.msra.mxu0 0.0
    %117 = vmatprep.mubr.f32.mxu0 0.0
    %v118 = vand.u32 %v26, 4294901760
    %v119 = vsub.f32 %v26, %v118
    %v120 = vand.u32 %v119, 4294901760
    %v121 = vsub.f32 %v119, %v120
    %v122 = vand.u32 %v121, 4294901760
    %123 = vmatmul.mubr.f32.gmra.mrb[0].mxu0 %v122
    %v124 = vpop.f32.mrb[0].mxu0
    %v125 = vadd.f32 0.0, %v124
    %v126 = vpop.f32.mrb[0].mxu0
    %127 = vmatprep.mubr.f32.mxu0 0.0
    %v128 = vand.u32 %v29, 4294901760
    %v129 = vsub.f32 %v29, %v128
    %v130 = vand.u32 %v129, 4294901760
    %v131 = vsub.f32 %v129, %v130
    %v132 = vand.u32 %v131, 4294901760
    %133 = vmatmul.mubr.f32.gmra.mrb[0].mxu0 %v132
    %v134 = vpop.f32.mrb[0].mxu0
    %v135 = vadd.f32 0.0, %v134
    %v136 = vpop.f32.mrb[0].mxu0
    %137 = vmatprep.mubr.f32.mxu0 0.0
    %v138 = vand.u32 %v32, 4294901760
    %v139 = vsub.f32 %v32, %v138
    %v140 = vand.u32 %v139, 4294901760
    %v141 = vsub.f32 %v139, %v140
    %v142 = vand.u32 %v141, 4294901760
    %143 = vmatmul.mubr.f32.gmra.mrb[0].mxu0 %v142
    %v144 = vpop.f32.mrb[0].mxu0
    %v145 = vadd.f32 0.0, %v144
    %v146 = vpop.f32.mrb[0].mxu0
    %147 = vmatprep.mubr.f32.mxu0 0.0
    %v148 = vand.u32 %v35, 4294901760
    %v149 = vsub.f32 %v35, %v148
    %v150 = vand.u32 %v149, 4294901760
    %v151 = vsub.f32 %v149, %v150
    %v152 = vand.u32 %v151, 4294901760
    %153 = vmatmul.mubr.f32.gmra.mrb[0].mxu0 %v152
    %v154 = vpop.f32.mrb[0].mxu0
    %v155 = vadd.f32 0.0, %v154
    %v156 = vpop.f32.mrb[0].mxu0
    %157 = vmatprep.mubr.f32.mxu0 0.0
    %v158 = vand.u32 %v38, 4294901760
    %v159 = vsub.f32 %v38, %v158
    %v160 = vand.u32 %v159, 4294901760
    %v161 = vsub.f32 %v159, %v160
    %v162 = vand.u32 %v161, 4294901760
    %163 = vmatmul.mubr.f32.gmra.mrb[0].mxu0 %v162
    %v164 = vpop.f32.mrb[0].mxu0
    %v165 = vadd.f32 0.0, %v164
    %v166 = vpop.f32.mrb[0].mxu0
    %167 = vmatprep.mubr.f32.mxu0 0.0
    %v168 = vand.u32 %v41, 4294901760
    %v169 = vsub.f32 %v41, %v168
    %v170 = vand.u32 %v169, 4294901760
    %v171 = vsub.f32 %v169, %v170
    %v172 = vand.u32 %v171, 4294901760
    %173 = vmatmul.mubr.f32.gmra.mrb[0].mxu0 %v172
    %v174 = vpop.f32.mrb[0].mxu0
    %v175 = vadd.f32 0.0, %v174
    %v176 = vpop.f32.mrb[0].mxu0
    %177 = vmatprep.mubr.f32.mxu0 0.0
    %v178 = vand.u32 %v44, 4294901760
    %v179 = vsub.f32 %v44, %v178
    %v180 = vand.u32 %v179, 4294901760
    %v181 = vsub.f32 %v179, %v180
    %v182 = vand.u32 %v181, 4294901760
    %183 = vmatmul.mubr.f32.gmra.mrb[0].mxu0 %v182
    %v184 = vpop.f32.mrb[0].mxu0
    %v185 = vadd.f32 0.0, %v184
    %v186 = vpop.f32.mrb[0].mxu0
    %187 = vmatprep.mubr.f32.mxu0 0.0
    %v188 = vand.u32 %v47, 4294901760
    %v189 = vsub.f32 %v47, %v188
    %v190 = vand.u32 %v189, 4294901760
    %v191 = vsub.f32 %v189, %v190
    %v192 = vand.u32 %v191, 4294901760
    %193 = vmatmul.mubr.f32.gmra.mrb[0].mxu0 %v192
    %v194 = vpop.f32.mrb[0].mxu0
    %v195 = vadd.f32 0.0, %v194
    %v196 = vpop.f32.mrb[0].mxu0
    %197 = vdwg.mxu0
    %198 = vmatprep.subr.mxu0 0.0
    %v199 = vand.u32 %v20, 4294901760
    %v200 = vsub.f32 %v20, %v199
    %v201 = vand.u32 %v200, 4294901760
    %v202 = vsub.f32 %v200, %v201
    %v203 = vand.u32 %v202, 4294901760
    %204 = vmatpush1.msra.mxu0 %v203
    %205 = vmatprep.subr.mxu0 0.0
    %v206 = vand.u32 %v21, 4294901760
    %v207 = vsub.f32 %v21, %v206
    %v208 = vand.u32 %v207, 4294901760
    %v209 = vsub.f32 %v207, %v208
    %v210 = vand.u32 %v209, 4294901760
    %211 = vmatpush1.msra.mxu0 %v210
    %212 = vmatprep.subr.mxu0 0.0
    %v213 = vand.u32 %v22, 4294901760
    %v214 = vsub.f32 %v22, %v213
    %v215 = vand.u32 %v214, 4294901760
    %v216 = vsub.f32 %v214, %v215
    %v217 = vand.u32 %v216, 4294901760
    %218 = vmatpush1.msra.mxu0 %v217
    %219 = vmatprep.subr.mxu0 0.0
    %v220 = vand.u32 %v23, 4294901760
    %v221 = vsub.f32 %v23, %v220
    %v222 = vand.u32 %v221, 4294901760
    %v223 = vsub.f32 %v221, %v222
    %v224 = vand.u32 %v223, 4294901760
    %225 = vmatpush1.msra.mxu0 %v224
    %226 = vmatprep.subr.mxu0 0.0
    %227 = vmatpush1.msra.mxu0 0.0
    %228 = vmatprep.subr.mxu0 0.0
    %229 = vmatpush1.msra.mxu0 0.0
    %230 = vmatprep.subr.mxu0 0.0
    %231 = vmatpush1.msra.mxu0 0.0
    %232 = vmatprep.subr.mxu0 0.0
    %233 = vmatpush1.msra.mxu0 0.0
    %234 = vmatprep.subr.mxu0 0.0
    %235 = vmatpush1.msra.mxu0 0.0
    %236 = vmatprep.subr.mxu0 0.0
    %237 = vmatpush1.msra.mxu0 0.0
    %238 = vmatprep.subr.mxu0 0.0
    %239 = vmatpush1.msra.mxu0 0.0
    %240 = vmatprep.subr.mxu0 0.0
    %241 = vmatpush1.msra.mxu0 0.0
    %242 = vmatprep.subr.mxu0 0.0
    %243 = vmatpush1.msra.mxu0 0.0
    %244 = vmatprep.subr.mxu0 0.0
    %245 = vmatpush1.msra.mxu0 0.0
    %246 = vmatprep.subr.mxu0 0.0
    %247 = vmatpush1.msra.mxu0 0.0
    %248 = vmatprep.subr.mxu0 0.0
    %249 = vmatpush1.msra.mxu0 0.0
    %250 = vmatprep.subr.mxu0 0.0
    %251 = vmatpush1.msra.mxu0 0.0
    %252 = vmatprep.subr.mxu0 0.0
    %253 = vmatpush1.msra.mxu0 0.0
    %254 = vmatprep.subr.mxu0 0.0
    %255 = vmatpush1.msra.mxu0 0.0
    %256 = vmatprep.subr.mxu0 0.0
    %257 = vmatpush1.msra.mxu0 0.0
    %258 = vmatprep.subr.mxu0 0.0
    %259 = vmatpush1.msra.mxu0 0.0
    %260 = vmatprep.subr.mxu0 0.0
    %261 = vmatpush1.msra.mxu0 0.0
    %262 = vmatprep.subr.mxu0 0.0
    %263 = vmatpush1.msra.mxu0 0.0
    %264 = vmatprep.subr.mxu0 0.0
    %265 = vmatpush1.msra.mxu0 0.0
    %266 = vmatprep.subr.mxu0 0.0
    %267 = vmatpush1.msra.mxu0 0.0
    %268 = vmatprep.subr.mxu0 0.0
    %269 = vmatpush1.msra.mxu0 0.0
    %270 = vmatprep.subr.mxu0 0.0
    %271 = vmatpush1.msra.mxu0 0.0
    %272 = vmatprep.subr.mxu0 0.0
    %273 = vmatpush1.msra.mxu0 0.0
    %274 = vmatprep.subr.mxu0 0.0
    %275 = vmatpush1.msra.mxu0 0.0
    %276 = vmatprep.subr.mxu0 0.0
    %277 = vmatpush1.msra.mxu0 0.0
    %278 = vmatprep.subr.mxu0 0.0
    %279 = vmatpush1.msra.mxu0 0.0
    %280 = vmatprep.subr.mxu0 0.0
    %281 = vmatpush1.msra.mxu0 0.0
    %282 = vmatprep.mubr.f32.mxu0 0.0
    %v283 = vand.u32 %v26, 4294901760
    %284 = vmatmul.mubr.f32.gmra.mrb[0].mxu0 %v283
    %v285 = vpop.f32.mrb[0].mxu0
    %v286 = vadd.f32 %v125, %v285
    %v287 = vpop.f32.mrb[0].mxu0
    %288 = vmatprep.mubr.f32.mxu0 0.0
    %v289 = vand.u32 %v29, 4294901760
    %290 = vmatmul.mubr.f32.gmra.mrb[0].mxu0 %v289
    %v291 = vpop.f32.mrb[0].mxu0
    %v292 = vadd.f32 %v135, %v291
    %v293 = vpop.f32.mrb[0].mxu0
    %294 = vmatprep.mubr.f32.mxu0 0.0
    %v295 = vand.u32 %v32, 4294901760
    %296 = vmatmul.mubr.f32.gmra.mrb[0].mxu0 %v295
    %v297 = vpop.f32.mrb[0].mxu0
    %v298 = vadd.f32 %v145, %v297
    %v299 = vpop.f32.mrb[0].mxu0
    %300 = vmatprep.mubr.f32.mxu0 0.0
    %v301 = vand.u32 %v35, 4294901760
    %302 = vmatmul.mubr.f32.gmra.mrb[0].mxu0 %v301
    %v303 = vpop.f32.mrb[0].mxu0
    %v304 = vadd.f32 %v155, %v303
    %v305 = vpop.f32.mrb[0].mxu0
    %306 = vmatprep.mubr.f32.mxu0 0.0
    %v307 = vand.u32 %v38, 4294901760
    %308 = vmatmul.mubr.f32.gmra.mrb[0].mxu0 %v307
    %v309 = vpop.f32.mrb[0].mxu0
    %v310 = vadd.f32 %v165, %v309
    %v311 = vpop.f32.mrb[0].mxu0
    %312 = vmatprep.mubr.f32.mxu0 0.0
    %v313 = vand.u32 %v41, 4294901760
    %314 = vmatmul.mubr.f32.gmra.mrb[0].mxu0 %v313
    %v315 = vpop.f32.mrb[0].mxu0
    %v316 = vadd.f32 %v175, %v315
    %v317 = vpop.f32.mrb[0].mxu0
    %318 = vmatprep.mubr.f32.mxu0 0.0
    %v319 = vand.u32 %v44, 4294901760
    %320 = vmatmul.mubr.f32.gmra.mrb[0].mxu0 %v319
    %v321 = vpop.f32.mrb[0].mxu0
    %v322 = vadd.f32 %v185, %v321
    %v323 = vpop.f32.mrb[0].mxu0
    %324 = vmatprep.mubr.f32.mxu0 0.0
    %v325 = vand.u32 %v47, 4294901760
    %326 = vmatmul.mubr.f32.gmra.mrb[0].mxu0 %v325
    %v327 = vpop.f32.mrb[0].mxu0
    %v328 = vadd.f32 %v195, %v327
    %v329 = vpop.f32.mrb[0].mxu0
    %330 = vdwg.mxu0
    %331 = vmatprep.subr.mxu0 0.0
    %v332 = vand.u32 %v20, 4294901760
    %v333 = vsub.f32 %v20, %v332
    %334 = vmatpush1.msra.mxu0 %v333
    %335 = vmatprep.subr.mxu0 0.0
    %v336 = vand.u32 %v21, 4294901760
    %v337 = vsub.f32 %v21, %v336
    %338 = vmatpush1.msra.mxu0 %v337
    %339 = vmatprep.subr.mxu0 0.0
    %v340 = vand.u32 %v22, 4294901760
    %v341 = vsub.f32 %v22, %v340
    %342 = vmatpush1.msra.mxu0 %v341
    %343 = vmatprep.subr.mxu0 0.0
    %v344 = vand.u32 %v23, 4294901760
    %v345 = vsub.f32 %v23, %v344
    %346 = vmatpush1.msra.mxu0 %v345
    %347 = vmatprep.subr.mxu0 0.0
    %348 = vmatpush1.msra.mxu0 0.0
    %349 = vmatprep.subr.mxu0 0.0
    %350 = vmatpush1.msra.mxu0 0.0
    %351 = vmatprep.subr.mxu0 0.0
    %352 = vmatpush1.msra.mxu0 0.0
    %353 = vmatprep.subr.mxu0 0.0
    %354 = vmatpush1.msra.mxu0 0.0
    %355 = vmatprep.subr.mxu0 0.0
    %356 = vmatpush1.msra.mxu0 0.0
    %357 = vmatprep.subr.mxu0 0.0
    %358 = vmatpush1.msra.mxu0 0.0
    %359 = vmatprep.subr.mxu0 0.0
    %360 = vmatpush1.msra.mxu0 0.0
    %361 = vmatprep.subr.mxu0 0.0
    %362 = vmatpush1.msra.mxu0 0.0
    %363 = vmatprep.subr.mxu0 0.0
    %364 = vmatpush1.msra.mxu0 0.0
    %365 = vmatprep.subr.mxu0 0.0
    %366 = vmatpush1.msra.mxu0 0.0
    %367 = vmatprep.subr.mxu0 0.0
    %368 = vmatpush1.msra.mxu0 0.0
    %369 = vmatprep.subr.mxu0 0.0
    %370 = vmatpush1.msra.mxu0 0.0
    %371 = vmatprep.subr.mxu0 0.0
    %372 = vmatpush1.msra.mxu0 0.0
    %373 = vmatprep.subr.mxu0 0.0
    %374 = vmatpush1.msra.mxu0 0.0
    %375 = vmatprep.subr.mxu0 0.0
    %376 = vmatpush1.msra.mxu0 0.0
    %377 = vmatprep.subr.mxu0 0.0
    %378 = vmatpush1.msra.mxu0 0.0
    %379 = vmatprep.subr.mxu0 0.0
    %380 = vmatpush1.msra.mxu0 0.0
    %381 = vmatprep.subr.mxu0 0.0
    %382 = vmatpush1.msra.mxu0 0.0
    %383 = vmatprep.subr.mxu0 0.0
    %384 = vmatpush1.msra.mxu0 0.0
    %385 = vmatprep.subr.mxu0 0.0
    %386 = vmatpush1.msra.mxu0 0.0
    %387 = vmatprep.subr.mxu0 0.0
    %388 = vmatpush1.msra.mxu0 0.0
    %389 = vmatprep.subr.mxu0 0.0
    %390 = vmatpush1.msra.mxu0 0.0
    %391 = vmatprep.subr.mxu0 0.0
    %392 = vmatpush1.msra.mxu0 0.0
    %393 = vmatprep.subr.mxu0 0.0
    %394 = vmatpush1.msra.mxu0 0.0
    %395 = vmatprep.subr.mxu0 0.0
    %396 = vmatpush1.msra.mxu0 0.0
    %397 = vmatprep.subr.mxu0 0.0
    %398 = vmatpush1.msra.mxu0 0.0
    %399 = vmatprep.subr.mxu0 0.0
    %400 = vmatpush1.msra.mxu0 0.0
    %401 = vmatprep.subr.mxu0 0.0
    %402 = vmatpush1.msra.mxu0 0.0
    %403 = vmatprep.mubr.f32.mxu0 0.0
    %v404 = vand.u32 %v26, 4294901760
    %v405 = vsub.f32 %v26, %v404
    %406 = vmatmul.mubr.f32.gmra.mrb[0].mxu0 %v405
    %v407 = vpop.f32.mrb[0].mxu0
    %v408 = vadd.f32 %v286, %v407
    %v409 = vpop.f32.mrb[0].mxu0
    %410 = vmatprep.mubr.f32.mxu0 0.0
    %v411 = vand.u32 %v29, 4294901760
    %v412 = vsub.f32 %v29, %v411
    %413 = vmatmul.mubr.f32.gmra.mrb[0].mxu0 %v412
    %v414 = vpop.f32.mrb[0].mxu0
    %v415 = vadd.f32 %v292, %v414
    %v416 = vpop.f32.mrb[0].mxu0
    %417 = vmatprep.mubr.f32.mxu0 0.0
    %v418 = vand.u32 %v32, 4294901760
    %v419 = vsub.f32 %v32, %v418
    %420 = vmatmul.mubr.f32.gmra.mrb[0].mxu0 %v419
    %v421 = vpop.f32.mrb[0].mxu0
    %v422 = vadd.f32 %v298, %v421
    %v423 = vpop.f32.mrb[0].mxu0
    %424 = vmatprep.mubr.f32.mxu0 0.0
    %v425 = vand.u32 %v35, 4294901760
    %v426 = vsub.f32 %v35, %v425
    %427 = vmatmul.mubr.f32.gmra.mrb[0].mxu0 %v426
    %v428 = vpop.f32.mrb[0].mxu0
    %v429 = vadd.f32 %v304, %v428
    %v430 = vpop.f32.mrb[0].mxu0
    %431 = vmatprep.mubr.f32.mxu0 0.0
    %v432 = vand.u32 %v38, 4294901760
    %v433 = vsub.f32 %v38, %v432
    %434 = vmatmul.mubr.f32.gmra.mrb[0].mxu0 %v433
    %v435 = vpop.f32.mrb[0].mxu0
    %v436 = vadd.f32 %v310, %v435
    %v437 = vpop.f32.mrb[0].mxu0
    %438 = vmatprep.mubr.f32.mxu0 0.0
    %v439 = vand.u32 %v41, 4294901760
    %v440 = vsub.f32 %v41, %v439
    %441 = vmatmul.mubr.f32.gmra.mrb[0].mxu0 %v440
    %v442 = vpop.f32.mrb[0].mxu0
    %v443 = vadd.f32 %v316, %v442
    %v444 = vpop.f32.mrb[0].mxu0
    %445 = vmatprep.mubr.f32.mxu0 0.0
    %v446 = vand.u32 %v44, 4294901760
    %v447 = vsub.f32 %v44, %v446
    %448 = vmatmul.mubr.f32.gmra.mrb[0].mxu0 %v447
    %v449 = vpop.f32.mrb[0].mxu0
    %v450 = vadd.f32 %v322, %v449
    %v451 = vpop.f32.mrb[0].mxu0
    %452 = vmatprep.mubr.f32.mxu0 0.0
    %v453 = vand.u32 %v47, 4294901760
    %v454 = vsub.f32 %v47, %v453
    %455 = vmatmul.mubr.f32.gmra.mrb[0].mxu0 %v454
    %v456 = vpop.f32.mrb[0].mxu0
    %v457 = vadd.f32 %v328, %v456
    %v458 = vpop.f32.mrb[0].mxu0
    %459 = vdwg.mxu0
    %460 = vmatprep.subr.mxu0 0.0
    %v461 = vand.u32 %v20, 4294901760
    %462 = vmatpush1.msra.mxu0 %v461
    %463 = vmatprep.subr.mxu0 0.0
    %v464 = vand.u32 %v21, 4294901760
    %465 = vmatpush1.msra.mxu0 %v464
    %466 = vmatprep.subr.mxu0 0.0
    %v467 = vand.u32 %v22, 4294901760
    %468 = vmatpush1.msra.mxu0 %v467
    %469 = vmatprep.subr.mxu0 0.0
    %v470 = vand.u32 %v23, 4294901760
    %471 = vmatpush1.msra.mxu0 %v470
    %472 = vmatprep.subr.mxu0 0.0
    %473 = vmatpush1.msra.mxu0 0.0
    %474 = vmatprep.subr.mxu0 0.0
    %475 = vmatpush1.msra.mxu0 0.0
    %476 = vmatprep.subr.mxu0 0.0
    %477 = vmatpush1.msra.mxu0 0.0
    %478 = vmatprep.subr.mxu0 0.0
    %479 = vmatpush1.msra.mxu0 0.0
    %480 = vmatprep.subr.mxu0 0.0
    %481 = vmatpush1.msra.mxu0 0.0
    %482 = vmatprep.subr.mxu0 0.0
    %483 = vmatpush1.msra.mxu0 0.0
    %484 = vmatprep.subr.mxu0 0.0
    %485 = vmatpush1.msra.mxu0 0.0
    %486 = vmatprep.subr.mxu0 0.0
    %487 = vmatpush1.msra.mxu0 0.0
    %488 = vmatprep.subr.mxu0 0.0
    %489 = vmatpush1.msra.mxu0 0.0
    %490 = vmatprep.subr.mxu0 0.0
    %491 = vmatpush1.msra.mxu0 0.0
    %492 = vmatprep.subr.mxu0 0.0
    %493 = vmatpush1.msra.mxu0 0.0
    %494 = vmatprep.subr.mxu0 0.0
    %495 = vmatpush1.msra.mxu0 0.0
    %496 = vmatprep.subr.mxu0 0.0
    %497 = vmatpush1.msra.mxu0 0.0
    %498 = vmatprep.subr.mxu0 0.0
    %499 = vmatpush1.msra.mxu0 0.0
    %500 = vmatprep.subr.mxu0 0.0
    %501 = vmatpush1.msra.mxu0 0.0
    %502 = vmatprep.subr.mxu0 0.0
    %503 = vmatpush1.msra.mxu0 0.0
    %504 = vmatprep.subr.mxu0 0.0
    %505 = vmatpush1.msra.mxu0 0.0
    %506 = vmatprep.subr.mxu0 0.0
    %507 = vmatpush1.msra.mxu0 0.0
    %508 = vmatprep.subr.mxu0 0.0
    %509 = vmatpush1.msra.mxu0 0.0
    %510 = vmatprep.subr.mxu0 0.0
    %511 = vmatpush1.msra.mxu0 0.0
    %512 = vmatprep.subr.mxu0 0.0
    %513 = vmatpush1.msra.mxu0 0.0
    %514 = vmatprep.subr.mxu0 0.0
    %515 = vmatpush1.msra.mxu0 0.0
    %516 = vmatprep.subr.mxu0 0.0
    %517 = vmatpush1.msra.mxu0 0.0
    %518 = vmatprep.subr.mxu0 0.0
    %519 = vmatpush1.msra.mxu0 0.0
    %520 = vmatprep.subr.mxu0 0.0
    %521 = vmatpush1.msra.mxu0 0.0
    %522 = vmatprep.subr.mxu0 0.0
    %523 = vmatpush1.msra.mxu0 0.0
    %524 = vmatprep.subr.mxu0 0.0
    %525 = vmatpush1.msra.mxu0 0.0
    %526 = vmatprep.subr.mxu0 0.0
    %527 = vmatpush1.msra.mxu0 0.0
    %528 = vmatprep.mubr.f32.mxu0 0.0
    %v529 = vand.u32 %v26, 4294901760
    %v530 = vsub.f32 %v26, %v529
    %v531 = vand.u32 %v530, 4294901760
    %532 = vmatmul.mubr.f32.gmra.mrb[0].mxu0 %v531
    %v533 = vpop.f32.mrb[0].mxu0
    %v534 = vadd.f32 %v408, %v533
    %v535 = vpop.f32.mrb[0].mxu0
    %536 = vmatprep.mubr.f32.mxu0 0.0
    %v537 = vand.u32 %v29, 4294901760
    %v538 = vsub.f32 %v29, %v537
    %v539 = vand.u32 %v538, 4294901760
    %540 = vmatmul.mubr.f32.gmra.mrb[0].mxu0 %v539
    %v541 = vpop.f32.mrb[0].mxu0
    %v542 = vadd.f32 %v415, %v541
    %v543 = vpop.f32.mrb[0].mxu0
    %544 = vmatprep.mubr.f32.mxu0 0.0
    %v545 = vand.u32 %v32, 4294901760
    %v546 = vsub.f32 %v32, %v545
    %v547 = vand.u32 %v546, 4294901760
    %548 = vmatmul.mubr.f32.gmra.mrb[0].mxu0 %v547
    %v549 = vpop.f32.mrb[0].mxu0
    %v550 = vadd.f32 %v422, %v549
    %v551 = vpop.f32.mrb[0].mxu0
    %552 = vmatprep.mubr.f32.mxu0 0.0
    %v553 = vand.u32 %v35, 4294901760
    %v554 = vsub.f32 %v35, %v553
    %v555 = vand.u32 %v554, 4294901760
    %556 = vmatmul.mubr.f32.gmra.mrb[0].mxu0 %v555
    %v557 = vpop.f32.mrb[0].mxu0
    %v558 = vadd.f32 %v429, %v557
    %v559 = vpop.f32.mrb[0].mxu0
    %560 = vmatprep.mubr.f32.mxu0 0.0
    %v561 = vand.u32 %v38, 4294901760
    %v562 = vsub.f32 %v38, %v561
    %v563 = vand.u32 %v562, 4294901760
    %564 = vmatmul.mubr.f32.gmra.mrb[0].mxu0 %v563
    %v565 = vpop.f32.mrb[0].mxu0
    %v566 = vadd.f32 %v436, %v565
    %v567 = vpop.f32.mrb[0].mxu0
    %568 = vmatprep.mubr.f32.mxu0 0.0
    %v569 = vand.u32 %v41, 4294901760
    %v570 = vsub.f32 %v41, %v569
    %v571 = vand.u32 %v570, 4294901760
    %572 = vmatmul.mubr.f32.gmra.mrb[0].mxu0 %v571
    %v573 = vpop.f32.mrb[0].mxu0
    %v574 = vadd.f32 %v443, %v573
    %v575 = vpop.f32.mrb[0].mxu0
    %576 = vmatprep.mubr.f32.mxu0 0.0
    %v577 = vand.u32 %v44, 4294901760
    %v578 = vsub.f32 %v44, %v577
    %v579 = vand.u32 %v578, 4294901760
    %580 = vmatmul.mubr.f32.gmra.mrb[0].mxu0 %v579
    %v581 = vpop.f32.mrb[0].mxu0
    %v582 = vadd.f32 %v450, %v581
    %v583 = vpop.f32.mrb[0].mxu0
    %584 = vmatprep.mubr.f32.mxu0 0.0
    %v585 = vand.u32 %v47, 4294901760
    %v586 = vsub.f32 %v47, %v585
    %v587 = vand.u32 %v586, 4294901760
    %588 = vmatmul.mubr.f32.gmra.mrb[0].mxu0 %v587
    %v589 = vpop.f32.mrb[0].mxu0
    %v590 = vadd.f32 %v457, %v589
    %v591 = vpop.f32.mrb[0].mxu0
    %592 = vdwg.mxu0
    %593 = vmatprep.subr.mxu0 0.0
    %v594 = vand.u32 %v20, 4294901760
    %v595 = vsub.f32 %v20, %v594
    %v596 = vand.u32 %v595, 4294901760
    %597 = vmatpush1.msra.mxu0 %v596
    %598 = vmatprep.subr.mxu0 0.0
    %v599 = vand.u32 %v21, 4294901760
    %v600 = vsub.f32 %v21, %v599
    %v601 = vand.u32 %v600, 4294901760
    %602 = vmatpush1.msra.mxu0 %v601
    %603 = vmatprep.subr.mxu0 0.0
    %v604 = vand.u32 %v22, 4294901760
    %v605 = vsub.f32 %v22, %v604
    %v606 = vand.u32 %v605, 4294901760
    %607 = vmatpush1.msra.mxu0 %v606
    %608 = vmatprep.subr.mxu0 0.0
    %v609 = vand.u32 %v23, 4294901760
    %v610 = vsub.f32 %v23, %v609
    %v611 = vand.u32 %v610, 4294901760
    %612 = vmatpush1.msra.mxu0 %v611
    %613 = vmatprep.subr.mxu0 0.0
    %614 = vmatpush1.msra.mxu0 0.0
    %615 = vmatprep.subr.mxu0 0.0
    %616 = vmatpush1.msra.mxu0 0.0
    %617 = vmatprep.subr.mxu0 0.0
    %618 = vmatpush1.msra.mxu0 0.0
    %619 = vmatprep.subr.mxu0 0.0
    %620 = vmatpush1.msra.mxu0 0.0
    %621 = vmatprep.subr.mxu0 0.0
    %622 = vmatpush1.msra.mxu0 0.0
    %623 = vmatprep.subr.mxu0 0.0
    %624 = vmatpush1.msra.mxu0 0.0
    %625 = vmatprep.subr.mxu0 0.0
    %626 = vmatpush1.msra.mxu0 0.0
    %627 = vmatprep.subr.mxu0 0.0
    %628 = vmatpush1.msra.mxu0 0.0
    %629 = vmatprep.subr.mxu0 0.0
    %630 = vmatpush1.msra.mxu0 0.0
    %631 = vmatprep.subr.mxu0 0.0
    %632 = vmatpush1.msra.mxu0 0.0
    %633 = vmatprep.subr.mxu0 0.0
    %634 = vmatpush1.msra.mxu0 0.0
    %635 = vmatprep.subr.mxu0 0.0
    %636 = vmatpush1.msra.mxu0 0.0
    %637 = vmatprep.subr.mxu0 0.0
    %638 = vmatpush1.msra.mxu0 0.0
    %639 = vmatprep.subr.mxu0 0.0
    %640 = vmatpush1.msra.mxu0 0.0
    %641 = vmatprep.subr.mxu0 0.0
    %642 = vmatpush1.msra.mxu0 0.0
    %643 = vmatprep.subr.mxu0 0.0
    %644 = vmatpush1.msra.mxu0 0.0
    %645 = vmatprep.subr.mxu0 0.0
    %646 = vmatpush1.msra.mxu0 0.0
    %647 = vmatprep.subr.mxu0 0.0
    %648 = vmatpush1.msra.mxu0 0.0
    %649 = vmatprep.subr.mxu0 0.0
    %650 = vmatpush1.msra.mxu0 0.0
    %651 = vmatprep.subr.mxu0 0.0
    %652 = vmatpush1.msra.mxu0 0.0
    %653 = vmatprep.subr.mxu0 0.0
    %654 = vmatpush1.msra.mxu0 0.0
    %655 = vmatprep.subr.mxu0 0.0
    %656 = vmatpush1.msra.mxu0 0.0
    %657 = vmatprep.subr.mxu0 0.0
    %658 = vmatpush1.msra.mxu0 0.0
    %659 = vmatprep.subr.mxu0 0.0
    %660 = vmatpush1.msra.mxu0 0.0
    %661 = vmatprep.subr.mxu0 0.0
    %662 = vmatpush1.msra.mxu0 0.0
    %663 = vmatprep.subr.mxu0 0.0
    %664 = vmatpush1.msra.mxu0 0.0
    %665 = vmatprep.subr.mxu0 0.0
    %666 = vmatpush1.msra.mxu0 0.0
    %667 = vmatprep.subr.mxu0 0.0
    %668 = vmatpush1.msra.mxu0 0.0
    %669 = vmatprep.mubr.f32.mxu0 0.0
    %v670 = vand.u32 %v26, 4294901760
    %671 = vmatmul.mubr.f32.gmra.mrb[0].mxu0 %v670
    %v672 = vpop.f32.mrb[0].mxu0
    %v673 = vadd.f32 %v534, %v672
    %v674 = vpop.f32.mrb[0].mxu0
    %675 = vmatprep.mubr.f32.mxu0 0.0
    %v676 = vand.u32 %v29, 4294901760
    %677 = vmatmul.mubr.f32.gmra.mrb[0].mxu0 %v676
    %v678 = vpop.f32.mrb[0].mxu0
    %v679 = vadd.f32 %v542, %v678
    %v680 = vpop.f32.mrb[0].mxu0
    %681 = vmatprep.mubr.f32.mxu0 0.0
    %v682 = vand.u32 %v32, 4294901760
    %683 = vmatmul.mubr.f32.gmra.mrb[0].mxu0 %v682
    %v684 = vpop.f32.mrb[0].mxu0
    %v685 = vadd.f32 %v550, %v684
    %v686 = vpop.f32.mrb[0].mxu0
    %687 = vmatprep.mubr.f32.mxu0 0.0
    %v688 = vand.u32 %v35, 4294901760
    %689 = vmatmul.mubr.f32.gmra.mrb[0].mxu0 %v688
    %v690 = vpop.f32.mrb[0].mxu0
    %v691 = vadd.f32 %v558, %v690
    %v692 = vpop.f32.mrb[0].mxu0
    %693 = vmatprep.mubr.f32.mxu0 0.0
    %v694 = vand.u32 %v38, 4294901760
    %695 = vmatmul.mubr.f32.gmra.mrb[0].mxu0 %v694
    %v696 = vpop.f32.mrb[0].mxu0
    %v697 = vadd.f32 %v566, %v696
    %v698 = vpop.f32.mrb[0].mxu0
    %699 = vmatprep.mubr.f32.mxu0 0.0
    %v700 = vand.u32 %v41, 4294901760
    %701 = vmatmul.mubr.f32.gmra.mrb[0].mxu0 %v700
    %v702 = vpop.f32.mrb[0].mxu0
    %v703 = vadd.f32 %v574, %v702
    %v704 = vpop.f32.mrb[0].mxu0
    %705 = vmatprep.mubr.f32.mxu0 0.0
    %v706 = vand.u32 %v44, 4294901760
    %707 = vmatmul.mubr.f32.gmra.mrb[0].mxu0 %v706
    %v708 = vpop.f32.mrb[0].mxu0
    %v709 = vadd.f32 %v582, %v708
    %v710 = vpop.f32.mrb[0].mxu0
    %711 = vmatprep.mubr.f32.mxu0 0.0
    %v712 = vand.u32 %v47, 4294901760
    %713 = vmatmul.mubr.f32.gmra.mrb[0].mxu0 %v712
    %v714 = vpop.f32.mrb[0].mxu0
    %v715 = vadd.f32 %v590, %v714
    %v716 = vpop.f32.mrb[0].mxu0
    %717 = vdwg.mxu0
    %718 = vmatprep.subr.mxu0 0.0
    %v719 = vand.u32 %v20, 4294901760
    %720 = vmatpush1.msra.mxu0 %v719
    %721 = vmatprep.subr.mxu0 0.0
    %v722 = vand.u32 %v21, 4294901760
    %723 = vmatpush1.msra.mxu0 %v722
    %724 = vmatprep.subr.mxu0 0.0
    %v725 = vand.u32 %v22, 4294901760
    %726 = vmatpush1.msra.mxu0 %v725
    %727 = vmatprep.subr.mxu0 0.0
    %v728 = vand.u32 %v23, 4294901760
    %729 = vmatpush1.msra.mxu0 %v728
    %730 = vmatprep.subr.mxu0 0.0
    %731 = vmatpush1.msra.mxu0 0.0
    %732 = vmatprep.subr.mxu0 0.0
    %733 = vmatpush1.msra.mxu0 0.0
    %734 = vmatprep.subr.mxu0 0.0
    %735 = vmatpush1.msra.mxu0 0.0
    %736 = vmatprep.subr.mxu0 0.0
    %737 = vmatpush1.msra.mxu0 0.0
    %738 = vmatprep.subr.mxu0 0.0
    %739 = vmatpush1.msra.mxu0 0.0
    %740 = vmatprep.subr.mxu0 0.0
    %741 = vmatpush1.msra.mxu0 0.0
    %742 = vmatprep.subr.mxu0 0.0
    %743 = vmatpush1.msra.mxu0 0.0
    %744 = vmatprep.subr.mxu0 0.0
    %745 = vmatpush1.msra.mxu0 0.0
    %746 = vmatprep.subr.mxu0 0.0
    %747 = vmatpush1.msra.mxu0 0.0
    %748 = vmatprep.subr.mxu0 0.0
    %749 = vmatpush1.msra.mxu0 0.0
    %750 = vmatprep.subr.mxu0 0.0
    %751 = vmatpush1.msra.mxu0 0.0
    %752 = vmatprep.subr.mxu0 0.0
    %753 = vmatpush1.msra.mxu0 0.0
    %754 = vmatprep.subr.mxu0 0.0
    %755 = vmatpush1.msra.mxu0 0.0
    %756 = vmatprep.subr.mxu0 0.0
    %757 = vmatpush1.msra.mxu0 0.0
    %758 = vmatprep.subr.mxu0 0.0
    %759 = vmatpush1.msra.mxu0 0.0
    %760 = vmatprep.subr.mxu0 0.0
    %761 = vmatpush1.msra.mxu0 0.0
    %762 = vmatprep.subr.mxu0 0.0
    %763 = vmatpush1.msra.mxu0 0.0
    %764 = vmatprep.subr.mxu0 0.0
    %765 = vmatpush1.msra.mxu0 0.0
    %766 = vmatprep.subr.mxu0 0.0
    %767 = vmatpush1.msra.mxu0 0.0
    %768 = vmatprep.subr.mxu0 0.0
    %769 = vmatpush1.msra.mxu0 0.0
    %770 = vmatprep.subr.mxu0 0.0
    %771 = vmatpush1.msra.mxu0 0.0
    %772 = vmatprep.subr.mxu0 0.0
    %773 = vmatpush1.msra.mxu0 0.0
    %774 = vmatprep.subr.mxu0 0.0
    %775 = vmatpush1.msra.mxu0 0.0
    %776 = vmatprep.subr.mxu0 0.0
    %777 = vmatpush1.msra.mxu0 0.0
    %778 = vmatprep.subr.mxu0 0.0
    %779 = vmatpush1.msra.mxu0 0.0
    %780 = vmatprep.subr.mxu0 0.0
    %781 = vmatpush1.msra.mxu0 0.0
    %782 = vmatprep.subr.mxu0 0.0
    %783 = vmatpush1.msra.mxu0 0.0
    %784 = vmatprep.subr.mxu0 0.0
    %785 = vmatpush1.msra.mxu0 0.0
    %786 = vmatprep.mubr.f32.mxu0 0.0
    %v787 = vand.u32 %v26, 4294901760
    %788 = vmatmul.mubr.f32.gmra.mrb[0].mxu0 %v787
    %v789 = vpop.f32.mrb[0].mxu0
    %v790 = vadd.f32 %v673, %v789
    %v791 = vpop.f32.mrb[0].mxu0
    %792 = vmatprep.mubr.f32.mxu0 0.0
    %v793 = vand.u32 %v29, 4294901760
    %794 = vmatmul.mubr.f32.gmra.mrb[0].mxu0 %v793
    %v795 = vpop.f32.mrb[0].mxu0
    %v796 = vadd.f32 %v679, %v795
    %v797 = vpop.f32.mrb[0].mxu0
    %798 = vmatprep.mubr.f32.mxu0 0.0
    %v799 = vand.u32 %v32, 4294901760
    %800 = vmatmul.mubr.f32.gmra.mrb[0].mxu0 %v799
    %v801 = vpop.f32.mrb[0].mxu0
    %v802 = vadd.f32 %v685, %v801
    %v803 = vpop.f32.mrb[0].mxu0
    %804 = vmatprep.mubr.f32.mxu0 0.0
    %v805 = vand.u32 %v35, 4294901760
    %806 = vmatmul.mubr.f32.gmra.mrb[0].mxu0 %v805
    %v807 = vpop.f32.mrb[0].mxu0
    %v808 = vadd.f32 %v691, %v807
    %v809 = vpop.f32.mrb[0].mxu0
    %810 = vmatprep.mubr.f32.mxu0 0.0
    %v811 = vand.u32 %v38, 4294901760
    %812 = vmatmul.mubr.f32.gmra.mrb[0].mxu0 %v811
    %v813 = vpop.f32.mrb[0].mxu0
    %v814 = vadd.f32 %v697, %v813
    %v815 = vpop.f32.mrb[0].mxu0
    %816 = vmatprep.mubr.f32.mxu0 0.0
    %v817 = vand.u32 %v41, 4294901760
    %818 = vmatmul.mubr.f32.gmra.mrb[0].mxu0 %v817
    %v819 = vpop.f32.mrb[0].mxu0
    %v820 = vadd.f32 %v703, %v819
    %v821 = vpop.f32.mrb[0].mxu0
    %822 = vmatprep.mubr.f32.mxu0 0.0
    %v823 = vand.u32 %v44, 4294901760
    %824 = vmatmul.mubr.f32.gmra.mrb[0].mxu0 %v823
    %v825 = vpop.f32.mrb[0].mxu0
    %v826 = vadd.f32 %v709, %v825
    %v827 = vpop.f32.mrb[0].mxu0
    %828 = vmatprep.mubr.f32.mxu0 0.0
    %v829 = vand.u32 %v47, 4294901760
    %830 = vmatmul.mubr.f32.gmra.mrb[0].mxu0 %v829
    %v831 = vpop.f32.mrb[0].mxu0
    %v832 = vadd.f32 %v715, %v831
    %v833 = vpop.f32.mrb[0].mxu0
    %834 = vdwg.mxu0
    %vm835 = vcmask 64512
    %836 = vst.msk [vmem:[#allocation2] sm:$0xff] %vm835, %v790
    %837 = vst.msk [vmem:[#allocation2 + $0x8] sm:$0xff] %vm835, %v796
    %838 = vst.msk [vmem:[#allocation2 + $0x10] sm:$0xff] %vm835, %v802
    %839 = vst.msk [vmem:[#allocation2 + $0x18] sm:$0xff] %vm835, %v808
    %840 = vst.msk [vmem:[#allocation2 + $0x20] sm:$0xff] %vm835, %v814
    %841 = vst.msk [vmem:[#allocation2 + $0x28] sm:$0xff] %vm835, %v820
    %842 = vst.msk [vmem:[#allocation2 + $0x30] sm:$0xff] %vm835, %v826
    %843 = vst.msk [vmem:[#allocation2 + $0x38] sm:$0xff] %vm835, %v832
    // Predicated region
    $region10: #{avg_pool_2x2.1} parent=1 // pred_check
      _
    $region11: #{avg_pool_2x2.1} parent=1 // pred_check_branch
      %845 = sbr.rel (0) target = $region13
    $region12: #{avg_pool_2x2.1} parent=1 // pred_region
      %s847 = ssub.s32 1024, 1024
      %848 = vsyncadd [#allocation3], %s847
      %s849 = sshll.u32 [#allocation2], 4
      %s850 = int_to_ptr.vmem [resolvable:$true] %s849
      %855 = dma.vmem_to_hbm [thread:$0]  %s850, 1024, %s2, [#allocation3], 128, 128, 8
    $region13: #{avg_pool_2x2.1} parent=1 // pred_fallthru
      _
    // Predicated region
    $region14: #{avg_pool_2x2.1} parent=1 // pred_check
      _
    $region15: #{avg_pool_2x2.1} parent=1 // pred_check_branch
      %857 = sbr.rel (0) target = $region17
    $region16: #{avg_pool_2x2.1} parent=1 // pred_region
      %858 = dma.done [#allocation3], 1024
    $region17: #{avg_pool_2x2.1} parent=1 // pred_fallthru
      _
    %859 = vsyncpa [#allocation3], 1

</llo_original>
